<compile_context>
chip_gen: v6e
topology: v6e:2x2x1
jax: 0.10.0
libtpu: 0.0.40
codegen_flags: <defaults>
</compile_context>

<pallas_src>
import jax
import jax.numpy as jnp
from jax.experimental import pallas as pl
from jax.experimental.pallas import tpu as pltpu


def actor_attention_kernel(q_ref, key_ref, val_ref, mask_ref,
                           wq_ref, bq_ref, wk_ref, bk_ref,
                           wv_ref, bv_ref, wfc2_ref, bfc2_ref,
                           out_ref):
    TB, S, D = key_ref.shape
    inv_sqrt_d = 1.0 / jnp.sqrt(jnp.float32(D))

    # ---- tiny per-tile weight math (O(TB*D^2) on the MXU; the O(B*S*D^2)
    #      K/V projections are folded away algebraically).
    qp = jax.lax.dot_general(                       # q' = query @ Wq^T + bq
        q_ref[...], wq_ref[...],
        dimension_numbers=(((1,), (1,)), ((), ())),
        preferred_element_type=jnp.float32) + bq_ref[...]            # (TB, D)
    t = jax.lax.dot_general(                        # t = q' @ Wk
        qp, wk_ref[...],
        dimension_numbers=(((1,), (0,)), ((), ())),
        preferred_element_type=jnp.float32)                          # (TB, D)
    alpha = jnp.sum(qp * bk_ref[...], axis=-1, keepdims=True)        # bk·q'  (TB, 1)

    u = jax.lax.dot_general(                        # u = wfc2 @ Wv
        wfc2_ref[...], wv_ref[...],
        dimension_numbers=(((1,), (0,)), ((), ())),
        preferred_element_type=jnp.float32)                          # (1, D)
    c = jnp.sum(bv_ref[...] * wfc2_ref[...], axis=-1, keepdims=True)  # bv·wfc2 (1, 1)

    neg = (1.0 - mask_ref[...]) * (-1e9)                             # (TB, S)

    # ---- streaming pass over raw key: VPU multiply + lane reduce
    dot = jnp.sum(key_ref[...] * t[:, None, :], axis=-1) + alpha     # (TB, S)
    logits = dot * inv_sqrt_d + neg
    logits = logits - jnp.max(logits, axis=1, keepdims=True)
    e = jnp.exp(logits)
    denom = jnp.sum(e, axis=1, keepdims=True)
    r = pl.reciprocal(denom, approx=True)
    r = r * (2.0 - denom * r)                      # one Newton step -> ~f32-exact
    attn = e * r                                                     # (TB, S)

    # ---- streaming pass over raw value + second masked softmax
    s_val = jnp.sum(val_ref[...] * u, axis=-1) + c                   # (TB, S)
    o = attn * s_val + bfc2_ref[...]
    o = o + neg
    o = o - jnp.max(o, axis=1, keepdims=True)
    eo = jnp.exp(o)
    denom2 = jnp.sum(eo, axis=1, keepdims=True)
    r2 = pl.reciprocal(denom2, approx=True)
    r2 = r2 * (2.0 - denom2 * r2)
    out = eo * r2                                                    # (TB, S)

    # single lane-dense store: [output | attention] packed on the lane axis
    out_ref[...] = jnp.concatenate([out, attn], axis=1)              # (TB, 2S)


def _choose_batch_tile(B, S, D):
    """Pick the batch tile so double-buffered f32 streaming data stays ~<= 8 MiB."""
    budget = 8 * 1024 * 1024
    per_row = (2 * S * D + D + 3 * S) * 4 * 2    # key+value+q+mask+out, x2 buffers
    tb = max(1, budget // per_row)
    if tb >= B:
        return B
    return max(8, (tb // 8) * 8)                 # keep sublane alignment


def actor_attention(query, key, value, mask, params):
    """query: (B,1,D), key/value: (B,S,D), mask: (B,S,1) or (B,S) of {0,1} (1 = keep).

    Returns (output, attention_weights), each of shape (B, S, 1) like the PyTorch module.
    """
    B, S, D = key.shape
    wq, bq, wk, bk, wv, bv, wfc2, bfc2 = params

    q2 = query.reshape(B, D)                     # drop singleton query length (free)
    m2 = mask.reshape(B, S).astype(jnp.float32)  # lane-dense mask (free)

    TB = _choose_batch_tile(B, S, D)
    grid = (pl.cdiv(B, TB),)
    const2 = lambda i: (0, 0)                    # weights: DMA'd once, never re-fetched

    combined = pl.pallas_call(
        actor_attention_kernel,
        out_shape=jax.ShapeDtypeStruct((B, 2 * S), jnp.float32),
        grid=grid,
        in_specs=[
            pl.BlockSpec((TB, D), lambda i: (i, 0)),        # q2
            pl.BlockSpec((TB, S, D), lambda i: (i, 0, 0)),  # key  (streamed)
            pl.BlockSpec((TB, S, D), lambda i: (i, 0, 0)),  # value(streamed)
            pl.BlockSpec((TB, S), lambda i: (i, 0)),        # mask
            pl.BlockSpec((D, D), const2),                   # Wq
            pl.BlockSpec((1, D), const2),                   # bq
            pl.BlockSpec((D, D), const2),                   # Wk
            pl.BlockSpec((1, D), const2),                   # bk
            pl.BlockSpec((D, D), const2),                   # Wv
            pl.BlockSpec((1, D), const2),                   # bv
            pl.BlockSpec((1, D), const2),                   # Wfc2
            pl.BlockSpec((1, 1), const2),                   # bfc2
        ],
        out_specs=pl.BlockSpec((TB, 2 * S), lambda i: (i, 0)),
        compiler_params=pltpu.CompilerParams(
            dimension_semantics=("parallel",),              # megacore on v7x
            vmem_limit_bytes=32 * 1024 * 1024),             # > v5e 16 MiB scoped default
    )(q2, key, value, m2, wq, bq, wk, bk, wv, bv, wfc2, bfc2)

    out = combined[:, :S].reshape(B, S, 1)       # wrapper-side split/reshape is free
    attn = combined[:, S:].reshape(B, S, 1)
    return out, attn


def init_params(d_model):
    """Deterministic synthetic parameters (PyTorch Linear layout: W is (out, in))."""
    k = jax.random.PRNGKey(42)
    ks = jax.random.split(k, 8)
    scale = 1.0 / jnp.sqrt(jnp.float32(d_model))
    wq = jax.random.normal(ks[0], (d_model, d_model), jnp.float32) * scale
    bq = jax.random.normal(ks[1], (1, d_model), jnp.float32) * scale
    wk = jax.random.normal(ks[2], (d_model, d_model), jnp.float32) * scale
    bk = jax.random.normal(ks[3], (1, d_model), jnp.float32) * scale
    wv = jax.random.normal(ks[4], (d_model, d_model), jnp.float32) * scale
    bv = jax.random.normal(ks[5], (1, d_model), jnp.float32) * scale
    wfc2 = jax.random.normal(ks[6], (1, d_model), jnp.float32) * scale
    bfc2 = jax.random.normal(ks[7], (1, 1), jnp.float32) * scale
    return (wq, bq, wk, bk, wv, bv, wfc2, bfc2)


def reference(query, key, value, mask, params):
    """Pure-JAX reference mirroring the PyTorch forward exactly."""
    wq, bq, wk, bk, wv, bv, wfc2, bfc2 = params
    d = key.shape[-1]
    q = query @ wq.T + bq[0]
    k = key @ wk.T + bk[0]
    v = value @ wv.T + bv[0]
    m = 1.0 - mask
    dot = jnp.sum(k * q, axis=-1, keepdims=True) / jnp.sqrt(jnp.float32(d))
    logits = dot + m * (-1e9)
    logits = logits - jnp.max(logits, axis=1, keepdims=True)
    attn = jax.nn.softmax(logits, axis=1)
    o = attn * v
    o = o @ wfc2.T + bfc2[0]
    o = o + m * (-1e9)
    o = o - jnp.max(o, axis=1, keepdims=True)
    out = jax.nn.softmax(o, axis=1)
    return out, attn


if __name__ == "__main__":
    B, S, D = 2, 8, 32  # batch, seq_len, d_model

    key0 = jax.random.PRNGKey(0)
    kq, kk, kv, km = jax.random.split(key0, 4)
    query = jax.random.normal(kq, (B, 1, D), jnp.float32)
    key_in = jax.random.normal(kk, (B, S, D), jnp.float32)
    value = jax.random.normal(kv, (B, S, D), jnp.float32)
    mask = (jax.random.uniform(km, (B, S, 1)) > 0.3).astype(jnp.float32)

    params = init_params(D)

    out, attn = actor_attention(query, key_in, value, mask, params)
    out, attn = jax.block_until_ready((out, attn))

    ref_out, ref_attn = reference(query, key_in, value, mask, params)
    assert out.shape == (B, S, 1) and attn.shape == (B, S, 1)
    assert jnp.allclose(out, ref_out, atol=1e-5, rtol=1e-5), "output mismatch"
    assert jnp.allclose(attn, ref_attn, atol=1e-5, rtol=1e-5), "attention mismatch"

    print("KERNEL_OK")
</pallas_src>

<mosaic_0001>
module attributes {stable_mosaic.version = 11 : i64} {
  func.func @actor_attention_kernel(%arg0: i32, %arg1: memref<2x32xf32, #tpu.memory_space<vmem>>, %arg2: memref<2x8x32xf32, #tpu.memory_space<vmem>>, %arg3: memref<2x8x32xf32, #tpu.memory_space<vmem>>, %arg4: memref<2x8xf32, #tpu.memory_space<vmem>>, %arg5: memref<32x32xf32, #tpu.memory_space<vmem>>, %arg6: memref<1x32xf32, #tpu.memory_space<vmem>>, %arg7: memref<32x32xf32, #tpu.memory_space<vmem>>, %arg8: memref<1x32xf32, #tpu.memory_space<vmem>>, %arg9: memref<32x32xf32, #tpu.memory_space<vmem>>, %arg10: memref<1x32xf32, #tpu.memory_space<vmem>>, %arg11: memref<1x32xf32, #tpu.memory_space<vmem>>, %arg12: memref<1x1xf32, #tpu.memory_space<vmem>>, %arg13: memref<2x16xf32, #tpu.memory_space<vmem>>) attributes {dimension_semantics = [#tpu.dimension_semantics<parallel>], iteration_bounds = array<i64: 1>, scalar_prefetch = 0 : i64, scratch_operands = 0 : i64, tpu.core_type = #tpu.core_type<tc>, window_params = [{transform_indices = @transform_0, window_bounds = array<i64: 2, 32>}, {transform_indices = @transform_1, window_bounds = array<i64: 2, 8, 32>}, {transform_indices = @transform_2, window_bounds = array<i64: 2, 8, 32>}, {transform_indices = @transform_3, window_bounds = array<i64: 2, 8>}, {pipeline_mode = #tpu.pipeline_mode<synchronous>, transform_indices = @transform_4, window_bounds = array<i64: 32, 32>}, {pipeline_mode = #tpu.pipeline_mode<synchronous>, transform_indices = @transform_5, window_bounds = array<i64: 1, 32>}, {pipeline_mode = #tpu.pipeline_mode<synchronous>, transform_indices = @transform_6, window_bounds = array<i64: 32, 32>}, {pipeline_mode = #tpu.pipeline_mode<synchronous>, transform_indices = @transform_7, window_bounds = array<i64: 1, 32>}, {pipeline_mode = #tpu.pipeline_mode<synchronous>, transform_indices = @transform_8, window_bounds = array<i64: 32, 32>}, {pipeline_mode = #tpu.pipeline_mode<synchronous>, transform_indices = @transform_9, window_bounds = array<i64: 1, 32>}, {pipeline_mode = #tpu.pipeline_mode<synchronous>, transform_indices = @transform_10, window_bounds = array<i64: 1, 32>}, {pipeline_mode = #tpu.pipeline_mode<synchronous>, transform_indices = @transform_11, window_bounds = array<i64: 1, 1>}, {transform_indices = @transform_12, window_bounds = array<i64: 2, 16>}]} {
    %cst = arith.constant 3.200000e+01 : f32
    %0 = math.sqrt %cst : f32
    %cst_0 = arith.constant 1.000000e+00 : f32
    %1 = arith.divf %cst_0, %0 : f32
    %c0 = arith.constant 0 : index
    %c0_1 = arith.constant 0 : index
    %2 = vector.load %arg1[%c0, %c0_1] : memref<2x32xf32, #tpu.memory_space<vmem>>, vector<2x32xf32>
    %c0_2 = arith.constant 0 : index
    %c0_3 = arith.constant 0 : index
    %3 = vector.load %arg5[%c0_2, %c0_3] : memref<32x32xf32, #tpu.memory_space<vmem>>, vector<32x32xf32>
    %cst_4 = arith.constant dense<0.000000e+00> : vector<2x32xf32>
    %4 = tpu.matmul %2, %3, %cst_4 {dimension_numbers = #tpu.dot_dimension_numbers<[1], [1], [0], [0], [0, 0, 1, 0], [], []>} : vector<2x32xf32>, vector<32x32xf32>, vector<2x32xf32> -> vector<2x32xf32>
    %c0_5 = arith.constant 0 : index
    %c0_6 = arith.constant 0 : index
    %5 = vector.load %arg6[%c0_5, %c0_6] : memref<1x32xf32, #tpu.memory_space<vmem>>, vector<1x32xf32>
    %6 = vector.broadcast %5 : vector<1x32xf32> to vector<2x32xf32>
    %7 = arith.addf %4, %6 : vector<2x32xf32>
    %c0_7 = arith.constant 0 : index
    %c0_8 = arith.constant 0 : index
    %8 = vector.load %arg7[%c0_7, %c0_8] : memref<32x32xf32, #tpu.memory_space<vmem>>, vector<32x32xf32>
    %cst_9 = arith.constant dense<0.000000e+00> : vector<2x32xf32>
    %9 = tpu.matmul %7, %8, %cst_9 {dimension_numbers = #tpu.dot_dimension_numbers<[1], [0], [0], [1], [0, 0, 1, 1], [], []>} : vector<2x32xf32>, vector<32x32xf32>, vector<2x32xf32> -> vector<2x32xf32>
    %c0_10 = arith.constant 0 : index
    %c0_11 = arith.constant 0 : index
    %10 = vector.load %arg8[%c0_10, %c0_11] : memref<1x32xf32, #tpu.memory_space<vmem>>, vector<1x32xf32>
    %11 = vector.broadcast %10 : vector<1x32xf32> to vector<2x32xf32>
    %12 = arith.mulf %7, %11 : vector<2x32xf32>
    %cst_12 = arith.constant dense<0.000000e+00> : vector<2xf32>
    %13 = vector.multi_reduction <add>, %12, %cst_12 [1] : vector<2x32xf32> to vector<2xf32>
    %14 = vector.shape_cast %13 : vector<2xf32> to vector<2x1xf32>
    %c0_13 = arith.constant 0 : index
    %c0_14 = arith.constant 0 : index
    %15 = vector.load %arg11[%c0_13, %c0_14] : memref<1x32xf32, #tpu.memory_space<vmem>>, vector<1x32xf32>
    %c0_15 = arith.constant 0 : index
    %c0_16 = arith.constant 0 : index
    %16 = vector.load %arg9[%c0_15, %c0_16] : memref<32x32xf32, #tpu.memory_space<vmem>>, vector<32x32xf32>
    %cst_17 = arith.constant dense<0.000000e+00> : vector<1x32xf32>
    %17 = tpu.matmul %15, %16, %cst_17 {dimension_numbers = #tpu.dot_dimension_numbers<[1], [0], [0], [1], [0, 0, 1, 1], [], []>} : vector<1x32xf32>, vector<32x32xf32>, vector<1x32xf32> -> vector<1x32xf32>
    %c0_18 = arith.constant 0 : index
    %c0_19 = arith.constant 0 : index
    %18 = vector.load %arg10[%c0_18, %c0_19] : memref<1x32xf32, #tpu.memory_space<vmem>>, vector<1x32xf32>
    %c0_20 = arith.constant 0 : index
    %c0_21 = arith.constant 0 : index
    %19 = vector.load %arg11[%c0_20, %c0_21] : memref<1x32xf32, #tpu.memory_space<vmem>>, vector<1x32xf32>
    %20 = arith.mulf %18, %19 : vector<1x32xf32>
    %cst_22 = arith.constant dense<0.000000e+00> : vector<1xf32>
    %21 = vector.multi_reduction <add>, %20, %cst_22 [1] : vector<1x32xf32> to vector<1xf32>
    %22 = vector.shape_cast %21 : vector<1xf32> to vector<1x1xf32>
    %c0_23 = arith.constant 0 : index
    %c0_24 = arith.constant 0 : index
    %23 = vector.load %arg4[%c0_23, %c0_24] : memref<2x8xf32, #tpu.memory_space<vmem>>, vector<2x8xf32>
    %cst_25 = arith.constant 1.000000e+00 : f32
    %24 = vector.broadcast %cst_25 : f32 to vector<2x8xf32>
    %25 = arith.subf %24, %23 : vector<2x8xf32>
    %cst_26 = arith.constant -1.000000e+09 : f32
    %26 = vector.broadcast %cst_26 : f32 to vector<2x8xf32>
    %27 = arith.mulf %25, %26 : vector<2x8xf32>
    %c0_27 = arith.constant 0 : index
    %c0_28 = arith.constant 0 : index
    %c0_29 = arith.constant 0 : index
    %28 = vector.load %arg2[%c0_27, %c0_28, %c0_29] : memref<2x8x32xf32, #tpu.memory_space<vmem>>, vector<2x8x32xf32>
    %29 = vector.shape_cast %9 : vector<2x32xf32> to vector<2x1x32xf32>
    %30 = vector.broadcast %29 : vector<2x1x32xf32> to vector<2x8x32xf32>
    %31 = arith.mulf %28, %30 : vector<2x8x32xf32>
    %cst_30 = arith.constant dense<0.000000e+00> : vector<2x8xf32>
    %32 = vector.multi_reduction <add>, %31, %cst_30 [2] : vector<2x8x32xf32> to vector<2x8xf32>
    %33 = vector.broadcast %14 : vector<2x1xf32> to vector<2x8xf32>
    %34 = arith.addf %32, %33 : vector<2x8xf32>
    %35 = vector.broadcast %1 : f32 to vector<2x8xf32>
    %36 = arith.mulf %34, %35 : vector<2x8xf32>
    %37 = arith.addf %36, %27 : vector<2x8xf32>
    %cst_31 = arith.constant dense<0xFF800000> : vector<2xf32>
    %38 = vector.multi_reduction <maximumf>, %37, %cst_31 [1] : vector<2x8xf32> to vector<2xf32>
    %39 = vector.shape_cast %38 : vector<2xf32> to vector<2x1xf32>
    %40 = vector.broadcast %39 : vector<2x1xf32> to vector<2x8xf32>
    %41 = arith.subf %37, %40 : vector<2x8xf32>
    %42 = math.exp %41 : vector<2x8xf32>
    %cst_32 = arith.constant dense<0.000000e+00> : vector<2xf32>
    %43 = vector.multi_reduction <add>, %42, %cst_32 [1] : vector<2x8xf32> to vector<2xf32>
    %44 = vector.shape_cast %43 : vector<2xf32> to vector<2x1xf32>
    %45 = tpu.reciprocal %44 {approx = true} : vector<2x1xf32> -> vector<2x1xf32>
    %46 = arith.mulf %44, %45 : vector<2x1xf32>
    %cst_33 = arith.constant 2.000000e+00 : f32
    %47 = vector.broadcast %cst_33 : f32 to vector<2x1xf32>
    %48 = arith.subf %47, %46 : vector<2x1xf32>
    %49 = arith.mulf %45, %48 : vector<2x1xf32>
    %50 = vector.broadcast %49 : vector<2x1xf32> to vector<2x8xf32>
    %51 = arith.mulf %42, %50 : vector<2x8xf32>
    %c0_34 = arith.constant 0 : index
    %c0_35 = arith.constant 0 : index
    %c0_36 = arith.constant 0 : index
    %52 = vector.load %arg3[%c0_34, %c0_35, %c0_36] : memref<2x8x32xf32, #tpu.memory_space<vmem>>, vector<2x8x32xf32>
    %53 = vector.shape_cast %17 : vector<1x32xf32> to vector<1x1x32xf32>
    %54 = vector.broadcast %53 : vector<1x1x32xf32> to vector<2x8x32xf32>
    %55 = arith.mulf %52, %54 : vector<2x8x32xf32>
    %cst_37 = arith.constant dense<0.000000e+00> : vector<2x8xf32>
    %56 = vector.multi_reduction <add>, %55, %cst_37 [2] : vector<2x8x32xf32> to vector<2x8xf32>
    %57 = vector.broadcast %22 : vector<1x1xf32> to vector<2x8xf32>
    %58 = arith.addf %56, %57 : vector<2x8xf32>
    %59 = arith.mulf %51, %58 : vector<2x8xf32>
    %c0_38 = arith.constant 0 : index
    %c0_39 = arith.constant 0 : index
    %60 = vector.load %arg12[%c0_38, %c0_39] : memref<1x1xf32, #tpu.memory_space<vmem>>, vector<1x1xf32>
    %61 = vector.broadcast %60 : vector<1x1xf32> to vector<2x8xf32>
    %62 = arith.addf %59, %61 : vector<2x8xf32>
    %63 = arith.addf %62, %27 : vector<2x8xf32>
    %cst_40 = arith.constant dense<0xFF800000> : vector<2xf32>
    %64 = vector.multi_reduction <maximumf>, %63, %cst_40 [1] : vector<2x8xf32> to vector<2xf32>
    %65 = vector.shape_cast %64 : vector<2xf32> to vector<2x1xf32>
    %66 = vector.broadcast %65 : vector<2x1xf32> to vector<2x8xf32>
    %67 = arith.subf %63, %66 : vector<2x8xf32>
    %68 = math.exp %67 : vector<2x8xf32>
    %cst_41 = arith.constant dense<0.000000e+00> : vector<2xf32>
    %69 = vector.multi_reduction <add>, %68, %cst_41 [1] : vector<2x8xf32> to vector<2xf32>
    %70 = vector.shape_cast %69 : vector<2xf32> to vector<2x1xf32>
    %71 = tpu.reciprocal %70 {approx = true} : vector<2x1xf32> -> vector<2x1xf32>
    %72 = arith.mulf %70, %71 : vector<2x1xf32>
    %cst_42 = arith.constant 2.000000e+00 : f32
    %73 = vector.broadcast %cst_42 : f32 to vector<2x1xf32>
    %74 = arith.subf %73, %72 : vector<2x1xf32>
    %75 = arith.mulf %71, %74 : vector<2x1xf32>
    %76 = vector.broadcast %75 : vector<2x1xf32> to vector<2x8xf32>
    %77 = arith.mulf %68, %76 : vector<2x8xf32>
    %78 = tpu.concatenate %77, %51 in 1 : vector<2x8xf32>, vector<2x8xf32> -> vector<2x16xf32>
    %c0_43 = arith.constant 0 : index
    %c0_44 = arith.constant 0 : index
    %79 = vector.load %arg13[%c0_43, %c0_44] : memref<2x16xf32, #tpu.memory_space<vmem>>, vector<2x16xf32>
    tpu.vector_store %arg13[%c0_43, %c0_44], %78 {strides = array<i32>} : memref<2x16xf32, #tpu.memory_space<vmem>>, vector<2x16xf32>,
    return
  }
  func.func @transform_0(%arg0: i32) -> (i32, i32) {
    %c0_i32 = arith.constant 0 : i32
    %c0_i32_0 = arith.constant 0 : i32
    return %arg0, %c0_i32 : i32, i32
  }
  func.func @transform_1(%arg0: i32) -> (i32, i32, i32) {
    %c0_i32 = arith.constant 0 : i32
    %c0_i32_0 = arith.constant 0 : i32
    %c0_i32_1 = arith.constant 0 : i32
    return %arg0, %c0_i32, %c0_i32_0 : i32, i32, i32
  }
  func.func @transform_2(%arg0: i32) -> (i32, i32, i32) {
    %c0_i32 = arith.constant 0 : i32
    %c0_i32_0 = arith.constant 0 : i32
    %c0_i32_1 = arith.constant 0 : i32
    return %arg0, %c0_i32, %c0_i32_0 : i32, i32, i32
  }
  func.func @transform_3(%arg0: i32) -> (i32, i32) {
    %c0_i32 = arith.constant 0 : i32
    %c0_i32_0 = arith.constant 0 : i32
    return %arg0, %c0_i32 : i32, i32
  }
  func.func @transform_4(%arg0: i32) -> (i32, i32) {
    %c0_i32 = arith.constant 0 : i32
    %c0_i32_0 = arith.constant 0 : i32
    %c0_i32_1 = arith.constant 0 : i32
    return %c0_i32, %c0_i32_0 : i32, i32
  }
  func.func @transform_5(%arg0: i32) -> (i32, i32) {
    %c0_i32 = arith.constant 0 : i32
    %c0_i32_0 = arith.constant 0 : i32
    %c0_i32_1 = arith.constant 0 : i32
    return %c0_i32, %c0_i32_0 : i32, i32
  }
  func.func @transform_6(%arg0: i32) -> (i32, i32) {
    %c0_i32 = arith.constant 0 : i32
    %c0_i32_0 = arith.constant 0 : i32
    %c0_i32_1 = arith.constant 0 : i32
    return %c0_i32, %c0_i32_0 : i32, i32
  }
  func.func @transform_7(%arg0: i32) -> (i32, i32) {
    %c0_i32 = arith.constant 0 : i32
    %c0_i32_0 = arith.constant 0 : i32
    %c0_i32_1 = arith.constant 0 : i32
    return %c0_i32, %c0_i32_0 : i32, i32
  }
  func.func @transform_8(%arg0: i32) -> (i32, i32) {
    %c0_i32 = arith.constant 0 : i32
    %c0_i32_0 = arith.constant 0 : i32
    %c0_i32_1 = arith.constant 0 : i32
    return %c0_i32, %c0_i32_0 : i32, i32
  }
  func.func @transform_9(%arg0: i32) -> (i32, i32) {
    %c0_i32 = arith.constant 0 : i32
    %c0_i32_0 = arith.constant 0 : i32
    %c0_i32_1 = arith.constant 0 : i32
    return %c0_i32, %c0_i32_0 : i32, i32
  }
  func.func @transform_10(%arg0: i32) -> (i32, i32) {
    %c0_i32 = arith.constant 0 : i32
    %c0_i32_0 = arith.constant 0 : i32
    %c0_i32_1 = arith.constant 0 : i32
    return %c0_i32, %c0_i32_0 : i32, i32
  }
  func.func @transform_11(%arg0: i32) -> (i32, i32) {
    %c0_i32 = arith.constant 0 : i32
    %c0_i32_0 = arith.constant 0 : i32
    %c0_i32_1 = arith.constant 0 : i32
    return %c0_i32, %c0_i32_0 : i32, i32
  }
  func.func @transform_12(%arg0: i32) -> (i32, i32) {
    %c0_i32 = arith.constant 0 : i32
    %c0_i32_0 = arith.constant 0 : i32
    return %arg0, %c0_i32 : i32, i32
  }
}

</mosaic_0001>

<llo_original>
// kernel: tpu_custom_call.1
$region0: #{tpu_custom_call.1}
  #allocation0 [shape = 'u32[]', space=smem, size = 0x4, offset = 0x4, fixed_abs, tag = 'smem constant byte address 0x4 - core index']
  #allocation1 [shape = 'u32[144,128]{1,0:T(1,128)}', space=vmem, size = 0x12000, scoped, tag = 'internal scratch']
  #allocation2 [shape = 'f32[1,1]{1,0:T(1,128)S(1)}', space=vmem, size = 0x200, scoped, tag = 'scoped memory for tpu_custom_call.1']
  %s0 = inlined_call_operand.vmem [shape: f32[2,32], index: 0, kind: input, shape index: {}]
  %s1 = inlined_call_operand.hbm [shape: f32[2,8,32], index: 1, kind: input, shape index: {}]
  %s2 = inlined_call_operand.hbm [shape: f32[2,8,32], index: 2, kind: input, shape index: {}]
  %s3 = inlined_call_operand.vmem [shape: f32[2,8], index: 3, kind: input, shape index: {}]
  %s4 = inlined_call_operand.hbm [shape: f32[32,32], index: 4, kind: input, shape index: {}]
  %s5 = inlined_call_operand.vmem [shape: f32[1,32], index: 5, kind: input, shape index: {}]
  %s6 = inlined_call_operand.hbm [shape: f32[32,32], index: 6, kind: input, shape index: {}]
  %s7 = inlined_call_operand.vmem [shape: f32[1,32], index: 7, kind: input, shape index: {}]
  %s8 = inlined_call_operand.hbm [shape: f32[32,32], index: 8, kind: input, shape index: {}]
  %s9 = inlined_call_operand.vmem [shape: f32[1,32], index: 9, kind: input, shape index: {}]
  %s10 = inlined_call_operand.vmem [shape: f32[1,32], index: 10, kind: input, shape index: {}]
  %s11 = inlined_call_operand.<no memory space> [shape: f32[1,1], index: 11, kind: input, shape index: {}]
  %s12 = inlined_call_operand.hbm [shape: f32[2,16], index: 12, kind: output, shape index: {}]
  %s13 = sld [smem:[#allocation0]]
  $region78: #{tpu_custom_call.1} parent=0
    _
  %s15 = ssub.s32 1, %s13
  %s16 = scalar_select 0, %s15, %s13
  %v17 = vstv %s11
  %18 = vst [vmem:[#allocation2] sm:$0x1] %v17
  $region1: #{tpu_custom_call.1} parent=0
    #allocation3 [shape = 'u8[8192]{0}', space=vmem, size = 0x2000, scoped, tag = 'input window, operand 1, single buffered']
    #allocation4 [shape = 's32[1]{0}', space=sflag, size = 0x4, scoped, tag = 'scoped memory for tpu_custom_call.1']
    #allocation5 [shape = 's32[1]{0}', space=sflag, size = 0x4, scoped, tag = 'scoped memory for tpu_custom_call.1']
    #allocation6 [shape = 'u8[8192]{0}', space=vmem, size = 0x2000, scoped, tag = 'input window, operand 2, single buffered']
    #allocation7 [shape = 's32[1]{0}', space=sflag, size = 0x4, scoped, tag = 'scoped memory for tpu_custom_call.1']
    #allocation8 [shape = 'u8[16384]{0}', space=vmem, size = 0x4000, scoped, tag = 'input window, operand 4, single buffered']
    #allocation9 [shape = 'u8[16384]{0}', space=vmem, size = 0x4000, scoped, tag = 'input window, operand 6, single buffered']
    #allocation10 [shape = 's32[1]{0}', space=sflag, size = 0x4, scoped, tag = 'scoped memory for tpu_custom_call.1']
    #allocation11 [shape = 'u8[16384]{0}', space=vmem, size = 0x4000, scoped, tag = 'input window, operand 8, single buffered']
    #allocation12 [shape = 'u8[1024]{0}', space=vmem, size = 0x400, scoped, tag = 'output window, operand 0, single buffered']
    %19 = vsyncpa [#allocation4], 0
    %20 = vsyncpa [#allocation7], 0
    %21 = vsyncpa [#allocation10], 0
    %22 = vsyncpa [#allocation5], 0
    // Predicated region
    $region2: #{tpu_custom_call.1} parent=1 // pred_check
      _
    $region3: #{tpu_custom_call.1} parent=1 // pred_check_branch
      %24 = sbr.rel (0) target = $region5
    $region4: #{tpu_custom_call.1} parent=1 // pred_region
      _
    $region5: #{tpu_custom_call.1} parent=1 // pred_fallthru
      _
    // Predicated region
    $region6: #{tpu_custom_call.1} parent=1 // pred_check
      _
    $region7: #{tpu_custom_call.1} parent=1 // pred_check_branch
      %26 = sbr.rel (0) target = $region9
    $region8: #{tpu_custom_call.1} parent=1 // pred_region
      %s28 = ssub.s32 256, 256
      %29 = vsyncadd [#allocation4], %s28
      %s30 = sshll.u32 [#allocation3], 4
      %s31 = int_to_ptr.vmem [resolvable:$true] %s30
      %36 = dma.hbm_to_vmem [thread:$0]  %s1, 256, %s31, [#allocation4], 128, 128, 8
    $region9: #{tpu_custom_call.1} parent=1 // pred_fallthru
      _
    // Predicated region
    $region10: #{tpu_custom_call.1} parent=1 // pred_check
      _
    $region11: #{tpu_custom_call.1} parent=1 // pred_check_branch
      %38 = sbr.rel (0) target = $region13
    $region12: #{tpu_custom_call.1} parent=1 // pred_region
      %s40 = ssub.s32 256, 256
      %41 = vsyncadd [#allocation7], %s40
      %s42 = sshll.u32 [#allocation6], 4
      %s43 = int_to_ptr.vmem [resolvable:$true] %s42
      %48 = dma.hbm_to_vmem [thread:$0]  %s2, 256, %s43, [#allocation7], 128, 128, 8
    $region13: #{tpu_custom_call.1} parent=1 // pred_fallthru
      _
    // Predicated region
    $region14: #{tpu_custom_call.1} parent=1 // pred_check
      _
    $region15: #{tpu_custom_call.1} parent=1 // pred_check_branch
      %50 = sbr.rel (0) target = $region17
    $region16: #{tpu_custom_call.1} parent=1 // pred_region
      _
    $region17: #{tpu_custom_call.1} parent=1 // pred_fallthru
      _
    // Predicated region
    $region18: #{tpu_custom_call.1} parent=1 // pred_check
      _
    $region19: #{tpu_custom_call.1} parent=1 // pred_check_branch
      %52 = sbr.rel (0) target = $region21
    $region20: #{tpu_custom_call.1} parent=1 // pred_region
      %s54 = ssub.s32 512, 512
      %55 = vsyncadd [#allocation7], %s54
      %s56 = sshll.u32 [#allocation8], 4
      %s57 = int_to_ptr.vmem [resolvable:$true] %s56
      %62 = dma.hbm_to_vmem [thread:$0]  %s4, 512, %s57, [#allocation7], 128, 128, 8
    $region21: #{tpu_custom_call.1} parent=1 // pred_fallthru
      _
    // Predicated region
    $region22: #{tpu_custom_call.1} parent=1 // pred_check
      _
    $region23: #{tpu_custom_call.1} parent=1 // pred_check_branch
      %64 = sbr.rel (0) target = $region25
    $region24: #{tpu_custom_call.1} parent=1 // pred_region
      _
    $region25: #{tpu_custom_call.1} parent=1 // pred_fallthru
      _
    // Predicated region
    $region26: #{tpu_custom_call.1} parent=1 // pred_check
      _
    $region27: #{tpu_custom_call.1} parent=1 // pred_check_branch
      %66 = sbr.rel (0) target = $region29
    $region28: #{tpu_custom_call.1} parent=1 // pred_region
      %s68 = ssub.s32 512, 512
      %69 = vsyncadd [#allocation10], %s68
      %s70 = sshll.u32 [#allocation9], 4
      %s71 = int_to_ptr.vmem [resolvable:$true] %s70
      %76 = dma.hbm_to_vmem [thread:$0]  %s6, 512, %s71, [#allocation10], 128, 128, 8
    $region29: #{tpu_custom_call.1} parent=1 // pred_fallthru
      _
    // Predicated region
    $region30: #{tpu_custom_call.1} parent=1 // pred_check
      _
    $region31: #{tpu_custom_call.1} parent=1 // pred_check_branch
      %78 = sbr.rel (0) target = $region33
    $region32: #{tpu_custom_call.1} parent=1 // pred_region
      _
    $region33: #{tpu_custom_call.1} parent=1 // pred_fallthru
      _
    // Predicated region
    $region34: #{tpu_custom_call.1} parent=1 // pred_check
      _
    $region35: #{tpu_custom_call.1} parent=1 // pred_check_branch
      %80 = sbr.rel (0) target = $region37
    $region36: #{tpu_custom_call.1} parent=1 // pred_region
      %s82 = ssub.s32 512, 512
      %83 = vsyncadd [#allocation10], %s82
      %s84 = sshll.u32 [#allocation11], 4
      %s85 = int_to_ptr.vmem [resolvable:$true] %s84
      %90 = dma.hbm_to_vmem [thread:$0]  %s8, 512, %s85, [#allocation10], 128, 128, 8
    $region37: #{tpu_custom_call.1} parent=1 // pred_fallthru
      _
    // Predicated region
    $region38: #{tpu_custom_call.1} parent=1 // pred_check
      _
    $region39: #{tpu_custom_call.1} parent=1 // pred_check_branch
      %92 = sbr.rel (0) target = $region41
    $region40: #{tpu_custom_call.1} parent=1 // pred_region
      _
    $region41: #{tpu_custom_call.1} parent=1 // pred_fallthru
      _
    // Predicated region
    $region42: #{tpu_custom_call.1} parent=1 // pred_check
      _
    $region43: #{tpu_custom_call.1} parent=1 // pred_check_branch
      %94 = sbr.rel (0) target = $region45
    $region44: #{tpu_custom_call.1} parent=1 // pred_region
      _
    $region45: #{tpu_custom_call.1} parent=1 // pred_fallthru
      _
    // Predicated region
    $region46: #{tpu_custom_call.1} parent=1 // pred_check
      _
    $region47: #{tpu_custom_call.1} parent=1 // pred_check_branch
      %96 = sbr.rel (0) target = $region49
    $region48: #{tpu_custom_call.1} parent=1 // pred_region
      _
    $region49: #{tpu_custom_call.1} parent=1 // pred_fallthru
      _
    // Predicated region
    $region50: #{tpu_custom_call.1} parent=1 // pred_check
      _
    $region51: #{tpu_custom_call.1} parent=1 // pred_check_branch
      %98 = sbr.rel (0) target = $region53
    $region52: #{tpu_custom_call.1} parent=1 // pred_region
      %99 = dma.done [#allocation4], 256
    $region53: #{tpu_custom_call.1} parent=1 // pred_fallthru
      _
    // Predicated region
    $region54: #{tpu_custom_call.1} parent=1 // pred_check
      _
    $region55: #{tpu_custom_call.1} parent=1 // pred_check_branch
      %101 = sbr.rel (0) target = $region57
    $region56: #{tpu_custom_call.1} parent=1 // pred_region
      %102 = dma.done [#allocation7], 256
    $region57: #{tpu_custom_call.1} parent=1 // pred_fallthru
      _
    // Predicated region
    $region58: #{tpu_custom_call.1} parent=1 // pred_check
      _
    $region59: #{tpu_custom_call.1} parent=1 // pred_check_branch
      %104 = sbr.rel (0) target = $region61
    $region60: #{tpu_custom_call.1} parent=1 // pred_region
      %105 = dma.done [#allocation7], 512
    $region61: #{tpu_custom_call.1} parent=1 // pred_fallthru
      _
    // Predicated region
    $region62: #{tpu_custom_call.1} parent=1 // pred_check
      _
    $region63: #{tpu_custom_call.1} parent=1 // pred_check_branch
      %107 = sbr.rel (0) target = $region65
    $region64: #{tpu_custom_call.1} parent=1 // pred_region
      %108 = dma.done [#allocation10], 512
    $region65: #{tpu_custom_call.1} parent=1 // pred_fallthru
      _
    // Predicated region
    $region66: #{tpu_custom_call.1} parent=1 // pred_check
      _
    $region67: #{tpu_custom_call.1} parent=1 // pred_check_branch
      %110 = sbr.rel (0) target = $region69
    $region68: #{tpu_custom_call.1} parent=1 // pred_region
      %111 = dma.done [#allocation10], 512
    $region69: #{tpu_custom_call.1} parent=1 // pred_fallthru
      _
    %v112 = vld [vmem:[%s0] sm:$0x3]
    %v113 = vld [vmem:[#allocation8] sm:$0xff]
    %v114 = vld [vmem:[#allocation8 + $0x8] sm:$0xff]
    %v115 = vld [vmem:[#allocation8 + $0x10] sm:$0xff]
    %v116 = vld [vmem:[#allocation8 + $0x18] sm:$0xff]
    %v117 = vld [vmem:[%s5] sm:$0x1]
    %v119 = vlaneseq
    %v120 = vshrl.u32 %v119, 7
    %v121 = vsub.s32 0, %v120
    %v122 = vrot.slane %v117, %v121
    %vm124 = vcmask 261120
    %v126 = vsel %vm124, %v112, 0
    %v129 = vsel %vm124, %v113, 0
    %v132 = vsel %vm124, %v114, 0
    %v135 = vsel %vm124, %v115, 0
    %v138 = vsel %vm124, %v116, 0
    %140 = vmatprep.subr.mxu0 0.0
    %141 = vmatpush1.xpose.msra.mxu0 0.0
    %142 = vmatprep.subr.mxu0 0.0
    %143 = vmatpush1.xpose.msra.mxu0 0.0
    %144 = vmatprep.subr.mxu0 0.0
    %145 = vmatpush1.xpose.msra.mxu0 0.0
    %146 = vmatprep.subr.mxu0 0.0
    %147 = vmatpush1.xpose.msra.mxu0 0.0
    %148 = vmatprep.subr.mxu0 0.0
    %149 = vmatpush1.xpose.msra.mxu0 0.0
    %150 = vmatprep.subr.mxu0 0.0
    %151 = vmatpush1.xpose.msra.mxu0 0.0
    %152 = vmatprep.subr.mxu0 0.0
    %153 = vmatpush1.xpose.msra.mxu0 0.0
    %154 = vmatprep.subr.mxu0 0.0
    %155 = vmatpush1.xpose.msra.mxu0 0.0
    %156 = vmatprep.subr.mxu0 0.0
    %157 = vmatpush1.xpose.msra.mxu0 0.0
    %158 = vmatprep.subr.mxu0 0.0
    %159 = vmatpush1.xpose.msra.mxu0 0.0
    %160 = vmatprep.subr.mxu0 0.0
    %161 = vmatpush1.xpose.msra.mxu0 0.0
    %162 = vmatprep.subr.mxu0 0.0
    %163 = vmatpush1.xpose.msra.mxu0 0.0
    %164 = vmatprep.subr.mxu0 0.0
    %165 = vmatpush1.xpose.msra.mxu0 %v138
    %166 = vmatprep.subr.mxu0 0.0
    %167 = vmatpush1.xpose.msra.mxu0 %v135
    %168 = vmatprep.subr.mxu0 0.0
    %169 = vmatpush1.xpose.msra.mxu0 %v132
    %170 = vmatprep.subr.mxu0 0.0
    %171 = vmatpush1.xpose.msra.mxu0 %v129
    %172 = vmatprep.subr.mxu0 0.0
    %173 = vmatpush2.xpose.msra.mxu0 0.0
    %174 = vmatprep.subr.mxu0 0.0
    %175 = vmatpush2.xpose.msra.mxu0 0.0
    %176 = vmatprep.subr.mxu0 0.0
    %177 = vmatpush2.xpose.msra.mxu0 0.0
    %178 = vmatprep.subr.mxu0 0.0
    %179 = vmatpush2.xpose.msra.mxu0 0.0
    %180 = vmatprep.subr.mxu0 0.0
    %181 = vmatpush2.xpose.msra.mxu0 0.0
    %182 = vmatprep.subr.mxu0 0.0
    %183 = vmatpush2.xpose.msra.mxu0 0.0
    %184 = vmatprep.subr.mxu0 0.0
    %185 = vmatpush2.xpose.msra.mxu0 0.0
    %186 = vmatprep.subr.mxu0 0.0
    %187 = vmatpush2.xpose.msra.mxu0 0.0
    %188 = vmatprep.subr.mxu0 0.0
    %189 = vmatpush2.xpose.msra.mxu0 0.0
    %190 = vmatprep.subr.mxu0 0.0
    %191 = vmatpush2.xpose.msra.mxu0 0.0
    %192 = vmatprep.subr.mxu0 0.0
    %193 = vmatpush2.xpose.msra.mxu0 0.0
    %194 = vmatprep.subr.mxu0 0.0
    %195 = vmatpush2.xpose.msra.mxu0 0.0
    %196 = vmatprep.subr.mxu0 0.0
    %197 = vmatpush2.xpose.msra.mxu0 0.0
    %198 = vmatprep.subr.mxu0 0.0
    %199 = vmatpush2.xpose.msra.mxu0 0.0
    %200 = vmatprep.subr.mxu0 0.0
    %201 = vmatpush2.xpose.msra.mxu0 0.0
    %202 = vmatprep.subr.mxu0 0.0
    %203 = vmatpush2.xpose.msra.mxu0 0.0
    %204 = vmatprep.mubr.f32.mxu0 0.0
    %205 = vmatmul.mubr.f32.gmra.mxu0 %v126
    %v206 = vpop.f32.mrf.mxu0
    %v207 = vadd.f32 %v122, %v206
    %v208 = vpop.f32.mrf.mxu0
    %209 = vdwg.mxu0
    %v210 = vld [vmem:[#allocation9] sm:$0xff]
    %v211 = vld [vmem:[#allocation9 + $0x8] sm:$0xff]
    %v212 = vld [vmem:[#allocation9 + $0x10] sm:$0xff]
    %v213 = vld [vmem:[#allocation9 + $0x18] sm:$0xff]
    %v215 = vsel %vm124, %v207, 0
    %217 = vmatprep.subr.mxu0 0.0
    %218 = vmatpush1.msra.mxu0 0.0
    %219 = vmatprep.subr.mxu0 0.0
    %220 = vmatpush1.msra.mxu0 0.0
    %221 = vmatprep.subr.mxu0 0.0
    %222 = vmatpush1.msra.mxu0 0.0
    %223 = vmatprep.subr.mxu0 0.0
    %224 = vmatpush1.msra.mxu0 0.0
    %225 = vmatprep.subr.mxu0 0.0
    %226 = vmatpush1.msra.mxu0 0.0
    %227 = vmatprep.subr.mxu0 0.0
    %228 = vmatpush1.msra.mxu0 0.0
    %229 = vmatprep.subr.mxu0 0.0
    %230 = vmatpush1.msra.mxu0 0.0
    %231 = vmatprep.subr.mxu0 0.0
    %232 = vmatpush1.msra.mxu0 0.0
    %233 = vmatprep.subr.mxu0 0.0
    %234 = vmatpush1.msra.mxu0 0.0
    %235 = vmatprep.subr.mxu0 0.0
    %236 = vmatpush1.msra.mxu0 0.0
    %237 = vmatprep.subr.mxu0 0.0
    %238 = vmatpush1.msra.mxu0 0.0
    %239 = vmatprep.subr.mxu0 0.0
    %240 = vmatpush1.msra.mxu0 0.0
    %241 = vmatprep.subr.mxu0 0.0
    %242 = vmatpush1.msra.mxu0 %v213
    %243 = vmatprep.subr.mxu0 0.0
    %244 = vmatpush1.msra.mxu0 %v212
    %245 = vmatprep.subr.mxu0 0.0
    %246 = vmatpush1.msra.mxu0 %v211
    %247 = vmatprep.subr.mxu0 0.0
    %248 = vmatpush1.msra.mxu0 %v210
    %249 = vmatprep.subr.mxu0 0.0
    %250 = vmatpush2.msra.mxu0 0.0
    %251 = vmatprep.subr.mxu0 0.0
    %252 = vmatpush2.msra.mxu0 0.0
    %253 = vmatprep.subr.mxu0 0.0
    %254 = vmatpush2.msra.mxu0 0.0
    %255 = vmatprep.subr.mxu0 0.0
    %256 = vmatpush2.msra.mxu0 0.0
    %257 = vmatprep.subr.mxu0 0.0
    %258 = vmatpush2.msra.mxu0 0.0
    %259 = vmatprep.subr.mxu0 0.0
    %260 = vmatpush2.msra.mxu0 0.0
    %261 = vmatprep.subr.mxu0 0.0
    %262 = vmatpush2.msra.mxu0 0.0
    %263 = vmatprep.subr.mxu0 0.0
    %264 = vmatpush2.msra.mxu0 0.0
    %265 = vmatprep.subr.mxu0 0.0
    %266 = vmatpush2.msra.mxu0 0.0
    %267 = vmatprep.subr.mxu0 0.0
    %268 = vmatpush2.msra.mxu0 0.0
    %269 = vmatprep.subr.mxu0 0.0
    %270 = vmatpush2.msra.mxu0 0.0
    %271 = vmatprep.subr.mxu0 0.0
    %272 = vmatpush2.msra.mxu0 0.0
    %273 = vmatprep.subr.mxu0 0.0
    %274 = vmatpush2.msra.mxu0 0.0
    %275 = vmatprep.subr.mxu0 0.0
    %276 = vmatpush2.msra.mxu0 0.0
    %277 = vmatprep.subr.mxu0 0.0
    %278 = vmatpush2.msra.mxu0 0.0
    %279 = vmatprep.subr.mxu0 0.0
    %280 = vmatpush2.msra.mxu0 0.0
    %281 = vmatprep.mubr.f32.mxu0 0.0
    %282 = vmatmul.mubr.f32.gmra.mxu0 %v215
    %v283 = vpop.f32.mrf.mxu0
    %v284 = vadd.f32 0.0, %v283
    %v285 = vpop.f32.mrf.mxu0
    %286 = vdwg.mxu0
    %v287 = vld [vmem:[%s7] sm:$0x1]
    %v289 = vlaneseq
    %v290 = vshrl.u32 %v289, 7
    %v291 = vsub.s32 0, %v290
    %v292 = vrot.slane %v287, %v291
    %v294 = vmul.f32 %v207, %v292
    %vm295 = vcmask 254976
    %v296 = vsel %vm295, %v294, 0.0
    %297 = vadd.xlane.f32.xlu0 %v296
    %v298 = vpop.xlane.xlu0 %297
    %v299 = vld [vmem:[%s10] sm:$0x1]
    %v300 = vld [vmem:[#allocation11] sm:$0xff]
    %v301 = vld [vmem:[#allocation11 + $0x8] sm:$0xff]
    %v302 = vld [vmem:[#allocation11 + $0x10] sm:$0xff]
    %v303 = vld [vmem:[#allocation11 + $0x18] sm:$0xff]
    %v305 = vsel %vm124, %v299, 0
    %307 = vmatprep.subr.mxu0 0.0
    %308 = vmatpush1.msra.mxu0 0.0
    %309 = vmatprep.subr.mxu0 0.0
    %310 = vmatpush1.msra.mxu0 0.0
    %311 = vmatprep.subr.mxu0 0.0
    %312 = vmatpush1.msra.mxu0 0.0
    %313 = vmatprep.subr.mxu0 0.0
    %314 = vmatpush1.msra.mxu0 0.0
    %315 = vmatprep.subr.mxu0 0.0
    %316 = vmatpush1.msra.mxu0 0.0
    %317 = vmatprep.subr.mxu0 0.0
    %318 = vmatpush1.msra.mxu0 0.0
    %319 = vmatprep.subr.mxu0 0.0
    %320 = vmatpush1.msra.mxu0 0.0
    %321 = vmatprep.subr.mxu0 0.0
    %322 = vmatpush1.msra.mxu0 0.0
    %323 = vmatprep.subr.mxu0 0.0
    %324 = vmatpush1.msra.mxu0 0.0
    %325 = vmatprep.subr.mxu0 0.0
    %326 = vmatpush1.msra.mxu0 0.0
    %327 = vmatprep.subr.mxu0 0.0
    %328 = vmatpush1.msra.mxu0 0.0
    %329 = vmatprep.subr.mxu0 0.0
    %330 = vmatpush1.msra.mxu0 0.0
    %331 = vmatprep.subr.mxu0 0.0
    %332 = vmatpush1.msra.mxu0 %v303
    %333 = vmatprep.subr.mxu0 0.0
    %334 = vmatpush1.msra.mxu0 %v302
    %335 = vmatprep.subr.mxu0 0.0
    %336 = vmatpush1.msra.mxu0 %v301
    %337 = vmatprep.subr.mxu0 0.0
    %338 = vmatpush1.msra.mxu0 %v300
    %339 = vmatprep.subr.mxu0 0.0
    %340 = vmatpush2.msra.mxu0 0.0
    %341 = vmatprep.subr.mxu0 0.0
    %342 = vmatpush2.msra.mxu0 0.0
    %343 = vmatprep.subr.mxu0 0.0
    %344 = vmatpush2.msra.mxu0 0.0
    %345 = vmatprep.subr.mxu0 0.0
    %346 = vmatpush2.msra.mxu0 0.0
    %347 = vmatprep.subr.mxu0 0.0
    %348 = vmatpush2.msra.mxu0 0.0
    %349 = vmatprep.subr.mxu0 0.0
    %350 = vmatpush2.msra.mxu0 0.0
    %351 = vmatprep.subr.mxu0 0.0
    %352 = vmatpush2.msra.mxu0 0.0
    %353 = vmatprep.subr.mxu0 0.0
    %354 = vmatpush2.msra.mxu0 0.0
    %355 = vmatprep.subr.mxu0 0.0
    %356 = vmatpush2.msra.mxu0 0.0
    %357 = vmatprep.subr.mxu0 0.0
    %358 = vmatpush2.msra.mxu0 0.0
    %359 = vmatprep.subr.mxu0 0.0
    %360 = vmatpush2.msra.mxu0 0.0
    %361 = vmatprep.subr.mxu0 0.0
    %362 = vmatpush2.msra.mxu0 0.0
    %363 = vmatprep.subr.mxu0 0.0
    %364 = vmatpush2.msra.mxu0 0.0
    %365 = vmatprep.subr.mxu0 0.0
    %366 = vmatpush2.msra.mxu0 0.0
    %367 = vmatprep.subr.mxu0 0.0
    %368 = vmatpush2.msra.mxu0 0.0
    %369 = vmatprep.subr.mxu0 0.0
    %370 = vmatpush2.msra.mxu0 0.0
    %371 = vmatprep.mubr.f32.mxu0 0.0
    %372 = vmatmul.mubr.f32.gmra.mxu0 %v305
    %v373 = vpop.f32.mrf.mxu0
    %v374 = vadd.f32 0.0, %v373
    %v375 = vpop.f32.mrf.mxu0
    %376 = vdwg.mxu0
    %v377 = vld [vmem:[%s9] sm:$0x1]
    %v378 = vmul.f32 %v377, %v299
    %vm379 = vcmask 253952
    %v380 = vsel %vm379, %v378, 0.0
    %381 = vadd.xlane.f32.xlu0 %v380
    %v382 = vpop.xlane.xlu0 %381
    %v383 = vld [vmem:[%s3] sm:$0x3]
    %v384 = vsub.f32 1.0, %v383
    %v385 = vmul.f32 %v384, -1e+09
    %v386 = vld [vmem:[#allocation3] sm:$0xff]
    %v387 = vld [vmem:[#allocation3 + $0x8] sm:$0xff]
    %v390 = vunpack.c.l.s4 1966171168
    %v391 = vunpack.c.0.s8 %v390
    %v392 = vlaneseq
    %v393 = vshrl.u32 %v392, 7
    %v394 = vsub.s32 %v391, %v393
    %v395 = vrot.slane %v284, %v394
    %v396 = vcombine.high %v395, %v395
    %v398 = vunpack.c.l.s4 1966171168
    %v399 = vunpack.c.0.s8 %v398
    %v400 = vlaneseq
    %v401 = vshrl.u32 %v400, 7
    %v402 = vsub.s32 %v399, %v401
    %v403 = vrot.slane %v395, %v402
    %v405 = vunpack.c.l.s4 1966171168
    %v406 = vunpack.c.0.s8 %v405
    %v407 = vlaneseq
    %v408 = vshrl.u32 %v407, 7
    %v409 = vsub.s32 %v406, %v408
    %v410 = vrot.slane %v396, %v409
    %v411 = vlaneseq
    %v412 = vshrl.u32 %v411, 7
    %v413 = vsub.s32 0, %v412
    %v414 = vrot.slane %v403, %v413
    %v415 = vlaneseq
    %v416 = vshrl.u32 %v415, 7
    %v417 = vsub.s32 0, %v416
    %v418 = vrot.slane %v410, %v417
    %v421 = vmul.f32 %v386, %v414
    %v422 = vmul.f32 %v387, %v418
    %v423 = vsel %vm124, %v421, 0.0
    %424 = vadd.xlane.f32.xlu0 %v423
    %v425 = vpop.xlane.xlu0 %424
    %v426 = vsel %vm124, %v422, 0.0
    %427 = vadd.xlane.f32.xlu0 %v426
    %v428 = vpop.xlane.xlu0 %427
    %v430 = vlaneseq
    %v431 = vshrl.u32 %v430, 7
    %v432 = vsub.s32 0, %v431
    %v433 = vrot.slane %v298, %v432
    %v434 = vlaneseq
    %v435 = vshrl.u32 %v434, 7
    %v436 = vsub.s32 1, %v435
    %v437 = vrot.slane %v298, %v436
    %v440 = vadd.f32 %v425, %v433
    %v441 = vadd.f32 %v428, %v437
    %v442 = vmul.f32 %v440, 0.17677669
    %v443 = vmul.f32 %v441, 0.17677669
    %v445 = vlaneseq
    %v446 = vshrl.u32 %v445, 7
    %v447 = vsub.s32 0, %v446
    %v448 = vrot.slane %v385, %v447
    %450 = vbcast.lane.b32.xlu0 %v448, 256
    %v451 = vpop.permute.xlu0 %450
    %v452 = vlaneseq
    %v453 = vshrl.u32 %v452, 7
    %v454 = vsub.s32 1, %v453
    %v455 = vrot.slane %v385, %v454
    %457 = vbcast.lane.b32.xlu0 %v455, 256
    %v458 = vpop.permute.xlu0 %457
    %v461 = vadd.f32 %v442, %v451
    %v462 = vadd.f32 %v443, %v458
    %465 = vset.pattern.permute.xlu0 0
    %466 = vperm.xlu0 %465, %v461
    %v467 = vpop.permute.xlu0 %466
    %468 = vset.pattern.permute.xlu0 0
    %469 = vperm.xlu0 %468, %v462
    %v470 = vpop.permute.xlu0 %469
    %v471 = vlaneseq
    %v472 = vand.u32 %v471, 127
    %v473 = vlaneseq
    %v474 = vshrl.u32 %v473, 7
    %v475 = vsub.s32 %v472, %v474
    %v476 = vrot.slane %v467, %v475
    %v477 = vlaneseq
    %v478 = vshrl.u32 %v477, 7
    %v479 = vsub.s32 %v472, %v478
    %v480 = vrot.slane %v470, %v479
    %vm481 = vcmask 1041409
    %v482 = vsel %vm481, %v480, %v476
    %vm484 = vcmask 58368
    %v485 = vsel %vm484, %v482, -inf
    %486 = vmax.xlane.f32.xlu0 %v485
    %v487 = vpop.xlane.xlu0 %486
    %v489 = vlaneseq
    %v490 = vshrl.u32 %v489, 7
    %v491 = vsub.s32 0, %v490
    %v492 = vrot.slane %v487, %v491
    %v493 = vlaneseq
    %v494 = vshrl.u32 %v493, 7
    %v495 = vsub.s32 1, %v494
    %v496 = vrot.slane %v487, %v495
    %v499 = vsub.f32 %v461, %v492
    %v500 = vsub.f32 %v462, %v496
    %v501 = vmul.f32 %v499, 1.442695
    %v502 = vpow.pop %v501
    %v503 = vmul.f32 %v500, 1.442695
    %v504 = vpow.pop %v503
    %507 = vset.pattern.permute.xlu0 0
    %508 = vperm.xlu0 %507, %v502
    %v509 = vpop.permute.xlu0 %508
    %510 = vset.pattern.permute.xlu0 0
    %511 = vperm.xlu0 %510, %v504
    %v512 = vpop.permute.xlu0 %511
    %v513 = vlaneseq
    %v514 = vshrl.u32 %v513, 7
    %v515 = vsub.s32 %v472, %v514
    %v516 = vrot.slane %v509, %v515
    %v517 = vlaneseq
    %v518 = vshrl.u32 %v517, 7
    %v519 = vsub.s32 %v472, %v518
    %v520 = vrot.slane %v512, %v519
    %v521 = vsel %vm481, %v520, %v516
    %v523 = vsel %vm484, %v521, 0.0
    %524 = vadd.xlane.f32.xlu0 %v523
    %v525 = vpop.xlane.xlu0 %524
    %v526 = vrcp.pop %v525
    %v527 = vmul.f32 %v525, %v526
    %v528 = vsub.f32 2.0, %v527
    %v529 = vmul.f32 %v526, %v528
    %v531 = vlaneseq
    %v532 = vshrl.u32 %v531, 7
    %v533 = vsub.s32 0, %v532
    %v534 = vrot.slane %v529, %v533
    %v535 = vlaneseq
    %v536 = vshrl.u32 %v535, 7
    %v537 = vsub.s32 1, %v536
    %v538 = vrot.slane %v529, %v537
    %v541 = vmul.f32 %v502, %v534
    %v542 = vmul.f32 %v504, %v538
    %v543 = vld [vmem:[#allocation6] sm:$0xff]
    %v544 = vld [vmem:[#allocation6 + $0x8] sm:$0xff]
    %v545 = vlaneseq
    %v546 = vshrl.u32 %v545, 7
    %v547 = vsub.s32 0, %v546
    %v548 = vrot.slane %v374, %v547
    %v549 = vmul.f32 %v543, %v548
    %v550 = vmul.f32 %v544, %v548
    %v551 = vsel %vm124, %v549, 0.0
    %552 = vadd.xlane.f32.xlu0 %v551
    %v553 = vpop.xlane.xlu0 %552
    %v554 = vsel %vm124, %v550, 0.0
    %555 = vadd.xlane.f32.xlu0 %v554
    %v556 = vpop.xlane.xlu0 %555
    %v557 = vlaneseq
    %v558 = vshrl.u32 %v557, 7
    %v559 = vsub.s32 0, %v558
    %v560 = vrot.slane %v382, %v559
    %v561 = vadd.f32 %v553, %v560
    %v562 = vadd.f32 %v556, %v560
    %v563 = vmul.f32 %v541, %v561
    %v564 = vmul.f32 %v542, %v562
    %v565 = vld [vmem:[#allocation2] sm:$0x1]
    %v567 = vlaneseq
    %v568 = vshrl.u32 %v567, 7
    %v569 = vsub.s32 0, %v568
    %v570 = vrot.slane %v565, %v569
    %571 = vset.pattern.permute.xlu0 0
    %572 = vperm.xlu0 %571, %v570
    %v573 = vpop.permute.xlu0 %572
    %v575 = vadd.f32 %v563, %v573
    %v576 = vadd.f32 %v564, %v573
    %v577 = vadd.f32 %v575, %v451
    %v578 = vadd.f32 %v576, %v458
    %581 = vset.pattern.permute.xlu0 0
    %582 = vperm.xlu0 %581, %v577
    %v583 = vpop.permute.xlu0 %582
    %584 = vset.pattern.permute.xlu0 0
    %585 = vperm.xlu0 %584, %v578
    %v586 = vpop.permute.xlu0 %585
    %v587 = vlaneseq
    %v588 = vshrl.u32 %v587, 7
    %v589 = vsub.s32 %v472, %v588
    %v590 = vrot.slane %v583, %v589
    %v591 = vlaneseq
    %v592 = vshrl.u32 %v591, 7
    %v593 = vsub.s32 %v472, %v592
    %v594 = vrot.slane %v586, %v593
    %v595 = vsel %vm481, %v594, %v590
    %v597 = vsel %vm484, %v595, -inf
    %598 = vmax.xlane.f32.xlu0 %v597
    %v599 = vpop.xlane.xlu0 %598
    %v601 = vlaneseq
    %v602 = vshrl.u32 %v601, 7
    %v603 = vsub.s32 0, %v602
    %v604 = vrot.slane %v599, %v603
    %v605 = vlaneseq
    %v606 = vshrl.u32 %v605, 7
    %v607 = vsub.s32 1, %v606
    %v608 = vrot.slane %v599, %v607
    %v611 = vsub.f32 %v577, %v604
    %v612 = vsub.f32 %v578, %v608
    %v613 = vmul.f32 %v611, 1.442695
    %v614 = vpow.pop %v613
    %v615 = vmul.f32 %v612, 1.442695
    %v616 = vpow.pop %v615
    %619 = vset.pattern.permute.xlu0 0
    %620 = vperm.xlu0 %619, %v614
    %v621 = vpop.permute.xlu0 %620
    %622 = vset.pattern.permute.xlu0 0
    %623 = vperm.xlu0 %622, %v616
    %v624 = vpop.permute.xlu0 %623
    %v625 = vlaneseq
    %v626 = vshrl.u32 %v625, 7
    %v627 = vsub.s32 %v472, %v626
    %v628 = vrot.slane %v621, %v627
    %v629 = vlaneseq
    %v630 = vshrl.u32 %v629, 7
    %v631 = vsub.s32 %v472, %v630
    %v632 = vrot.slane %v624, %v631
    %v633 = vsel %vm481, %v632, %v628
    %v635 = vsel %vm484, %v633, 0.0
    %636 = vadd.xlane.f32.xlu0 %v635
    %v637 = vpop.xlane.xlu0 %636
    %v638 = vrcp.pop %v637
    %v639 = vmul.f32 %v637, %v638
    %v640 = vsub.f32 2.0, %v639
    %v641 = vmul.f32 %v638, %v640
    %v643 = vlaneseq
    %v644 = vshrl.u32 %v643, 7
    %v645 = vsub.s32 0, %v644
    %v646 = vrot.slane %v641, %v645
    %v647 = vlaneseq
    %v648 = vshrl.u32 %v647, 7
    %v649 = vsub.s32 1, %v648
    %v650 = vrot.slane %v641, %v649
    %v653 = vmul.f32 %v614, %v646
    %v654 = vmul.f32 %v616, %v650
    %657 = vset.pattern.permute.xlu0 0
    %658 = vperm.xlu0 %657, %v653
    %v659 = vpop.permute.xlu0 %658
    %660 = vset.pattern.permute.xlu0 0
    %661 = vperm.xlu0 %660, %v654
    %v662 = vpop.permute.xlu0 %661
    %v663 = vlaneseq
    %v664 = vshrl.u32 %v663, 7
    %v665 = vsub.s32 %v472, %v664
    %v666 = vrot.slane %v659, %v665
    %v667 = vlaneseq
    %v668 = vshrl.u32 %v667, 7
    %v669 = vsub.s32 %v472, %v668
    %v670 = vrot.slane %v662, %v669
    %v671 = vsel %vm481, %v670, %v666
    %675 = vset.pattern.permute.xlu0 0
    %676 = vperm.xlu0 %675, %v541
    %v677 = vpop.permute.xlu0 %676
    %678 = vset.pattern.permute.xlu0 0
    %679 = vperm.xlu0 %678, %v542
    %v680 = vpop.permute.xlu0 %679
    %v681 = vadd.s32 %v472, 4294967288
    %v682 = vlaneseq
    %v683 = vshrl.u32 %v682, 7
    %v684 = vsub.s32 %v681, %v683
    %v685 = vrot.slane %v677, %v684
    %v686 = vlaneseq
    %v687 = vshrl.u32 %v686, 7
    %v688 = vsub.s32 %v681, %v687
    %v689 = vrot.slane %v680, %v688
    %v690 = vsel %vm481, %v689, %v685
    %vm692 = vcmask 64512
    %v693 = vsel %vm692, %v671, %v690
    %vm694 = vcmask 123904
    %695 = vst.msk [vmem:[#allocation12] sm:$0x3] %vm694, %v693
    // Predicated region
    $region70: #{tpu_custom_call.1} parent=1 // pred_check
      _
    $region71: #{tpu_custom_call.1} parent=1 // pred_check_branch
      %697 = sbr.rel (0) target = $region73
    $region72: #{tpu_custom_call.1} parent=1 // pred_region
      %s699 = ssub.s32 32, 32
      %700 = vsyncadd [#allocation5], %s699
      %s702 = sshll.u32 [#allocation12], 4
      %s703 = int_to_ptr.vmem [resolvable:$true] %s702
      %705 = dma.vmem_to_hbm [thread:$0]  %s703, 32, %s12, [#allocation5]
    $region73: #{tpu_custom_call.1} parent=1 // pred_fallthru
      _
    // Predicated region
    $region74: #{tpu_custom_call.1} parent=1 // pred_check
      _
    $region75: #{tpu_custom_call.1} parent=1 // pred_check_branch
      %707 = sbr.rel (0) target = $region77
    $region76: #{tpu_custom_call.1} parent=1 // pred_region
      %708 = dma.done [#allocation5], 32
    $region77: #{tpu_custom_call.1} parent=1 // pred_fallthru
      _
    %709 = vsyncpa [#allocation4], 1
    %710 = vsyncpa [#allocation7], 1
    %711 = vsyncpa [#allocation10], 1
    %712 = vsyncpa [#allocation5], 1

</llo_original>
